<compile_context>
chip_gen: v5e
topology: v5e:2x2
jax: 0.10.0
libtpu: 0.0.40
codegen_flags: <defaults>
</compile_context>

<pallas_src>
import functools

import jax
import jax.numpy as jnp
from jax.experimental import pallas as pl
from jax.experimental.pallas import tpu as pltpu


def _mlp_kernel(x_ref, wh_ref, bh_ref, wl_ref, bl_ref, out_ref, *,
                num_hidden, typ, matmul_dtype, act_dtype):
    """Full MLP forward for one batch tile, entirely in VMEM.

    x_ref:  (width, tile)            transposed, feature-padded input (f32)
    wh_ref: (L-1, width, width)      packed transposed hidden weights (matmul_dtype)
    bh_ref: (L-1, width, 1)          packed hidden biases (f32)
    wl_ref: (width, 1)               fc9 weight, kept in f32
    bl_ref: (1, 1)                   fc9 bias, f32
    out_ref:(1, tile)                lane-dense output tile (f32)
    """
    act = jnp.tanh if typ == "tanh" else (lambda v: jnp.maximum(v, 0.0))

    h = x_ref[...]                                   # (width, tile) f32
    if h.dtype != act_dtype:
        h = h.astype(act_dtype)

    # Hidden layers fc1..fc{L-1}: h <- act(W_T @ h + b), all (width, tile).
    # MXU accumulates in f32; bias-add / activation run in act_dtype
    # (bf16 on v6e/v7x halves VPU/EUP work and vreg pressure).
    for layer in range(num_hidden):
        w = wh_ref[layer]                            # (width, width) matmul_dtype
        b = bh_ref[layer].astype(act_dtype)          # (width, 1)
        hm = h if h.dtype == matmul_dtype else h.astype(matmul_dtype)
        acc = jnp.dot(w, hm, preferred_element_type=jnp.float32)
        h = act(acc.astype(act_dtype) + b)

    # Final layer fc9 (width -> 1): VPU broadcast-multiply + sublane reduce in
    # f32 instead of a lane-sparse N=1 MXU matmul (weight never quantized).
    hf = h if h.dtype == jnp.float32 else h.astype(jnp.float32)
    out_ref[...] = jnp.sum(wl_ref[...] * hf, axis=0, keepdims=True) + bl_ref[...]


def _pack_params(params, width, matmul_dtype):
    """Pack (w, b) pairs once into slabs.

    params[l] = (w, b) with w: (in, out), b: (1, out)  (layer is x @ w + b).
    Hidden layers: transposed weights W_T = w.T (out, in) go into a zero-padded
    (L-1, width, width) slab (matmul_dtype); biases into (L-1, width, 1) f32.
    fc9 stays in f32: (width, 1) weight + (1, 1) bias.
    """
    L = len(params)
    nh = L - 1
    wh = jnp.zeros((nh, width, width), matmul_dtype)
    bh = jnp.zeros((nh, width, 1), jnp.float32)
    for l in range(nh):
        w, b = params[l]
        wt = w.T.astype(matmul_dtype)                                  # (out, in)
        wh = wh.at[l, : wt.shape[0], : wt.shape[1]].set(wt)
        bh = bh.at[l, : b.shape[1], 0].set(b[0].astype(jnp.float32))
    w9, b9 = params[-1]                                                # (width,1), (1,1)
    wl = jnp.zeros((width, 1), jnp.float32).at[: w9.shape[0], :].set(
        w9.astype(jnp.float32))
    bl = b9.astype(jnp.float32).reshape(1, 1)
    return wh, bh, wl, bl


def make_net_forward(params, depth, typ, *, tm=512,
                     matmul_dtype=jnp.float32, act_dtype=jnp.float32):
    """Build a jitted Pallas forward for Net(depth, typ).

    params: list of (w, b); w: [in, out], b: [1, out]
    depth in {3, 5, 9}; typ in {'tanh', 'RELU'} (static, like the PyTorch ifs).
    tm: max batch-tile size on the lane axis (multiple of 128).
    matmul_dtype: MXU input dtype (bf16 is a win on v5e/v6e/v7x; accumulation
                  is always f32).
    act_dtype:    dtype for bias-add / activation between layers; use bf16 only
                  on v6e/v7x (v5e has no bf16 VPU/EUP).
    """
    assert depth in (3, 5, 9)
    assert typ in ("tanh", "RELU")
    assert len(params) == depth
    assert tm % 128 == 0 and tm > 0

    C, width = params[0][0].shape
    assert C <= width, "packing assumes input_channels <= width"
    n_hidden = depth - 1

    # Pack once; packed slabs live on device and are captured by the jit.
    wh, bh, wl, bl = _pack_params(params, width, matmul_dtype)
    mm_bytes = jnp.dtype(matmul_dtype).itemsize

    kernel = functools.partial(
        _mlp_kernel, num_hidden=n_hidden, typ=typ,
        matmul_dtype=matmul_dtype, act_dtype=act_dtype)

    single = pl.Buffered(1)  # constant index_map -> single-buffer the params

    @jax.jit
    def forward(x):
        B = x.shape[0]
        # Batch tiling: lane tiles are multiples of 128; cap at tm; for padded
        # batches >= 256 keep at least 2 "parallel" grid steps (v7x dual-TC).
        b_pad0 = pl.cdiv(B, 128) * 128
        tile = min(tm, b_pad0)
        if b_pad0 >= 256:
            tile = min(tile, pl.cdiv(pl.cdiv(b_pad0, 2), 128) * 128)
        b_pad = pl.cdiv(B, tile) * tile
        grid = (b_pad // tile,)

        # Transposed, zero-padded input: (width, b_pad) with batch on lanes.
        xT = jnp.zeros((width, b_pad), jnp.float32).at[:C, :B].set(
            x.astype(jnp.float32).T)

        # VMEM budget: double-buffered x/out tiles + single-buffered params.
        est = (2 * width * tile * 4            # x tile (f32, double-buffered)
               + 2 * tile * 4                  # out tile (f32, double-buffered)
               + n_hidden * width * width * mm_bytes   # weight slab (x1)
               + n_hidden * width * 4 + width * 4 + 4)  # biases + fc9 head
        vmem_limit = int(min(48 << 20, max(16 << 20, 2 * est)))

        out_padded = pl.pallas_call(
            kernel,
            out_shape=jax.ShapeDtypeStruct((1, b_pad), jnp.float32),
            grid=grid,
            in_specs=[
                pl.BlockSpec((width, tile), lambda i: (0, i)),            # x
                pl.BlockSpec((n_hidden, width, width), lambda i: (0, 0, 0),
                             pipeline_mode=single),                       # W
                pl.BlockSpec((n_hidden, width, 1), lambda i: (0, 0, 0),
                             pipeline_mode=single),                       # b
                pl.BlockSpec((width, 1), lambda i: (0, 0),
                             pipeline_mode=single),                       # fc9 w
                pl.BlockSpec((1, 1), lambda i: (0, 0),
                             pipeline_mode=single),                       # fc9 b
            ],
            out_specs=pl.BlockSpec((1, tile), lambda i: (0, i)),          # lane-dense
            compiler_params=pltpu.CompilerParams(
                dimension_semantics=("parallel",),
                vmem_limit_bytes=vmem_limit),
        )(xT, wh, bh, wl, bl)

        return out_padded[:, :B].T  # (B, 1)

    return forward


def net_forward(x, params, depth, typ, *, tm=512,
                matmul_dtype=jnp.float32, act_dtype=jnp.float32):
    """One-shot convenience wrapper (prefer make_net_forward for repeated calls)."""
    return make_net_forward(params, depth, typ, tm=tm,
                            matmul_dtype=matmul_dtype, act_dtype=act_dtype)(x)


def init_params(key, input_channels, width, depth, typ):
    """Deterministic init mirroring Net.__init__ layer shapes.

    depth=3 -> fc1, fc2, fc9 ; depth=5 -> fc1..fc4, fc9 ; depth=9 -> fc1..fc8, fc9
    """
    if depth == 3:
        dims = [(input_channels, width), (width, width), (width, 1)]
    elif depth == 5:
        dims = [(input_channels, width)] + [(width, width)] * 3 + [(width, 1)]
    else:
        dims = [(input_channels, width)] + [(width, width)] * 7 + [(width, 1)]

    params = []
    for (fan_in, fan_out) in dims:
        key, kw, kb = jax.random.split(key, 3)
        if typ == "tanh":
            limit = (6.0 / (fan_in + fan_out)) ** 0.5      # Xavier uniform
        else:
            limit = (6.0 / fan_in) ** 0.5                  # Kaiming uniform
        w = jax.random.uniform(kw, (fan_in, fan_out), jnp.float32, -limit, limit)
        blim = 1.0 / (fan_in ** 0.5)
        b = jax.random.uniform(kb, (1, fan_out), jnp.float32, -blim, blim)
        params.append((w, b))
    return params


def reference_forward(x, params, typ):
    h = x
    for i, (w, b) in enumerate(params):
        h = jnp.dot(h, w, precision=jax.lax.Precision.HIGHEST) + b
        if i < len(params) - 1:
            h = jnp.tanh(h) if typ == "tanh" else jnp.maximum(h, 0.0)
    return h


def _check_close(out, ref, tol_frac):
    scale = 1.0 + float(jnp.max(jnp.abs(ref)))
    err = float(jnp.max(jnp.abs(out - ref)))
    assert bool(jnp.all(jnp.isfinite(out))), "non-finite output"
    assert err < tol_frac * scale, f"mismatch: max err {err} vs tol {tol_frac * scale}"


if __name__ == "__main__":
    key = jax.random.PRNGKey(0)

    batch = 16
    input_channels = 4
    width = 32

    kx, kx2, kp = jax.random.split(key, 3)
    x = jax.random.normal(kx, (batch, input_channels), jnp.float32)

    # depth=9 / RELU, f32 path (works on all generations)
    params9 = init_params(kp, input_channels, width, 9, "RELU")
    fwd9 = make_net_forward(params9, 9, "RELU")
    out9 = jax.block_until_ready(fwd9(x))
    ref9 = reference_forward(x, params9, "RELU")
    assert out9.shape == (batch, 1)
    _check_close(out9, ref9, 0.03)

    # depth=3 / tanh branch (f32)
    params3 = init_params(kp, input_channels, width, 3, "tanh")
    fwd3 = make_net_forward(params3, 3, "tanh")
    out3 = jax.block_until_ready(fwd3(x))
    ref3 = reference_forward(x, params3, "tanh")
    assert out3.shape == (batch, 1)
    _check_close(out3, ref3, 0.03)

    # depth=5 / RELU with bf16 MXU inputs + bf16 activations
    # (v6e/v7x fast path; on v5e keep act_dtype=f32).  Accumulation stays f32.
    params5 = init_params(kp, input_channels, width, 5, "RELU")
    fwd5_bf16 = make_net_forward(params5, 5, "RELU",
                                 matmul_dtype=jnp.bfloat16,
                                 act_dtype=jnp.bfloat16)
    out5 = jax.block_until_ready(fwd5_bf16(x))
    ref5 = reference_forward(x, params5, "RELU")
    assert out5.shape == (batch, 1)
    _check_close(out5, ref5, 0.10)

    # depth=5 / RELU f32 on a larger batch -> multi-tile "parallel" grid
    xb = jax.random.normal(kx2, (384, input_channels), jnp.float32)
    fwd5_f32 = make_net_forward(params5, 5, "RELU")
    outb = jax.block_until_ready(fwd5_f32(xb))
    refb = reference_forward(xb, params5, "RELU")
    assert outb.shape == (384, 1)
    _check_close(outb, refb, 0.03)

    print("KERNEL_OK")
</pallas_src>

<mosaic_0001>
module attributes {stable_mosaic.version = 11 : i64} {
  func.func @_mlp_kernel(%arg0: i32, %arg1: memref<32x128xf32, #tpu.memory_space<vmem>>, %arg2: memref<8x32x32xf32, #tpu.memory_space<vmem>>, %arg3: memref<8x32x1xf32, #tpu.memory_space<vmem>>, %arg4: memref<32x1xf32, #tpu.memory_space<vmem>>, %arg5: memref<1x1xf32, #tpu.memory_space<vmem>>, %arg6: memref<1x128xf32, #tpu.memory_space<vmem>>) attributes {dimension_semantics = [#tpu.dimension_semantics<parallel>], iteration_bounds = array<i64: 1>, scalar_prefetch = 0 : i64, scratch_operands = 0 : i64, tpu.core_type = #tpu.core_type<tc>, window_params = [{transform_indices = @transform_0, window_bounds = array<i64: 32, 128>}, {pipeline_mode = #tpu.pipeline_mode<synchronous>, transform_indices = @transform_1, window_bounds = array<i64: 8, 32, 32>}, {pipeline_mode = #tpu.pipeline_mode<synchronous>, transform_indices = @transform_2, window_bounds = array<i64: 8, 32, 1>}, {pipeline_mode = #tpu.pipeline_mode<synchronous>, transform_indices = @transform_3, window_bounds = array<i64: 32, 1>}, {pipeline_mode = #tpu.pipeline_mode<synchronous>, transform_indices = @transform_4, window_bounds = array<i64: 1, 1>}, {transform_indices = @transform_5, window_bounds = array<i64: 1, 128>}]} {
    %c0 = arith.constant 0 : index
    %c0_0 = arith.constant 0 : index
    %0 = vector.load %arg1[%c0, %c0_0] : memref<32x128xf32, #tpu.memory_space<vmem>>, vector<32x128xf32>
    %c0_1 = arith.constant 0 : index
    %c0_2 = arith.constant 0 : index
    %c0_3 = arith.constant 0 : index
    %1 = vector.load %arg2[%c0_1, %c0_2, %c0_3] : memref<8x32x32xf32, #tpu.memory_space<vmem>>, vector<1x32x32xf32>
    %2 = vector.shape_cast %1 : vector<1x32x32xf32> to vector<32x32xf32>
    %c0_4 = arith.constant 0 : index
    %c0_5 = arith.constant 0 : index
    %c0_6 = arith.constant 0 : index
    %3 = vector.load %arg3[%c0_4, %c0_5, %c0_6] : memref<8x32x1xf32, #tpu.memory_space<vmem>>, vector<1x32x1xf32>
    %4 = vector.shape_cast %3 : vector<1x32x1xf32> to vector<32x1xf32>
    %cst = arith.constant dense<0.000000e+00> : vector<32x128xf32>
    %5 = tpu.matmul %2, %0, %cst {dimension_numbers = #tpu.dot_dimension_numbers<[1], [0], [0], [1], [0, 0, 1, 1], [], []>} : vector<32x32xf32>, vector<32x128xf32>, vector<32x128xf32> -> vector<32x128xf32>
    %6 = vector.broadcast %4 : vector<32x1xf32> to vector<32x128xf32>
    %7 = arith.addf %5, %6 : vector<32x128xf32>
    %cst_7 = arith.constant 0.000000e+00 : f32
    %8 = vector.broadcast %cst_7 : f32 to vector<32x128xf32>
    %9 = arith.maximumf %7, %8 : vector<32x128xf32>
    %c1 = arith.constant 1 : index
    %c0_8 = arith.constant 0 : index
    %c0_9 = arith.constant 0 : index
    %10 = vector.load %arg2[%c1, %c0_8, %c0_9] : memref<8x32x32xf32, #tpu.memory_space<vmem>>, vector<1x32x32xf32>
    %11 = vector.shape_cast %10 : vector<1x32x32xf32> to vector<32x32xf32>
    %c1_10 = arith.constant 1 : index
    %c0_11 = arith.constant 0 : index
    %c0_12 = arith.constant 0 : index
    %12 = vector.load %arg3[%c1_10, %c0_11, %c0_12] : memref<8x32x1xf32, #tpu.memory_space<vmem>>, vector<1x32x1xf32>
    %13 = vector.shape_cast %12 : vector<1x32x1xf32> to vector<32x1xf32>
    %cst_13 = arith.constant dense<0.000000e+00> : vector<32x128xf32>
    %14 = tpu.matmul %11, %9, %cst_13 {dimension_numbers = #tpu.dot_dimension_numbers<[1], [0], [0], [1], [0, 0, 1, 1], [], []>} : vector<32x32xf32>, vector<32x128xf32>, vector<32x128xf32> -> vector<32x128xf32>
    %15 = vector.broadcast %13 : vector<32x1xf32> to vector<32x128xf32>
    %16 = arith.addf %14, %15 : vector<32x128xf32>
    %cst_14 = arith.constant 0.000000e+00 : f32
    %17 = vector.broadcast %cst_14 : f32 to vector<32x128xf32>
    %18 = arith.maximumf %16, %17 : vector<32x128xf32>
    %c2 = arith.constant 2 : index
    %c0_15 = arith.constant 0 : index
    %c0_16 = arith.constant 0 : index
    %19 = vector.load %arg2[%c2, %c0_15, %c0_16] : memref<8x32x32xf32, #tpu.memory_space<vmem>>, vector<1x32x32xf32>
    %20 = vector.shape_cast %19 : vector<1x32x32xf32> to vector<32x32xf32>
    %c2_17 = arith.constant 2 : index
    %c0_18 = arith.constant 0 : index
    %c0_19 = arith.constant 0 : index
    %21 = vector.load %arg3[%c2_17, %c0_18, %c0_19] : memref<8x32x1xf32, #tpu.memory_space<vmem>>, vector<1x32x1xf32>
    %22 = vector.shape_cast %21 : vector<1x32x1xf32> to vector<32x1xf32>
    %cst_20 = arith.constant dense<0.000000e+00> : vector<32x128xf32>
    %23 = tpu.matmul %20, %18, %cst_20 {dimension_numbers = #tpu.dot_dimension_numbers<[1], [0], [0], [1], [0, 0, 1, 1], [], []>} : vector<32x32xf32>, vector<32x128xf32>, vector<32x128xf32> -> vector<32x128xf32>
    %24 = vector.broadcast %22 : vector<32x1xf32> to vector<32x128xf32>
    %25 = arith.addf %23, %24 : vector<32x128xf32>
    %cst_21 = arith.constant 0.000000e+00 : f32
    %26 = vector.broadcast %cst_21 : f32 to vector<32x128xf32>
    %27 = arith.maximumf %25, %26 : vector<32x128xf32>
    %c3 = arith.constant 3 : index
    %c0_22 = arith.constant 0 : index
    %c0_23 = arith.constant 0 : index
    %28 = vector.load %arg2[%c3, %c0_22, %c0_23] : memref<8x32x32xf32, #tpu.memory_space<vmem>>, vector<1x32x32xf32>
    %29 = vector.shape_cast %28 : vector<1x32x32xf32> to vector<32x32xf32>
    %c3_24 = arith.constant 3 : index
    %c0_25 = arith.constant 0 : index
    %c0_26 = arith.constant 0 : index
    %30 = vector.load %arg3[%c3_24, %c0_25, %c0_26] : memref<8x32x1xf32, #tpu.memory_space<vmem>>, vector<1x32x1xf32>
    %31 = vector.shape_cast %30 : vector<1x32x1xf32> to vector<32x1xf32>
    %cst_27 = arith.constant dense<0.000000e+00> : vector<32x128xf32>
    %32 = tpu.matmul %29, %27, %cst_27 {dimension_numbers = #tpu.dot_dimension_numbers<[1], [0], [0], [1], [0, 0, 1, 1], [], []>} : vector<32x32xf32>, vector<32x128xf32>, vector<32x128xf32> -> vector<32x128xf32>
    %33 = vector.broadcast %31 : vector<32x1xf32> to vector<32x128xf32>
    %34 = arith.addf %32, %33 : vector<32x128xf32>
    %cst_28 = arith.constant 0.000000e+00 : f32
    %35 = vector.broadcast %cst_28 : f32 to vector<32x128xf32>
    %36 = arith.maximumf %34, %35 : vector<32x128xf32>
    %c4 = arith.constant 4 : index
    %c0_29 = arith.constant 0 : index
    %c0_30 = arith.constant 0 : index
    %37 = vector.load %arg2[%c4, %c0_29, %c0_30] : memref<8x32x32xf32, #tpu.memory_space<vmem>>, vector<1x32x32xf32>
    %38 = vector.shape_cast %37 : vector<1x32x32xf32> to vector<32x32xf32>
    %c4_31 = arith.constant 4 : index
    %c0_32 = arith.constant 0 : index
    %c0_33 = arith.constant 0 : index
    %39 = vector.load %arg3[%c4_31, %c0_32, %c0_33] : memref<8x32x1xf32, #tpu.memory_space<vmem>>, vector<1x32x1xf32>
    %40 = vector.shape_cast %39 : vector<1x32x1xf32> to vector<32x1xf32>
    %cst_34 = arith.constant dense<0.000000e+00> : vector<32x128xf32>
    %41 = tpu.matmul %38, %36, %cst_34 {dimension_numbers = #tpu.dot_dimension_numbers<[1], [0], [0], [1], [0, 0, 1, 1], [], []>} : vector<32x32xf32>, vector<32x128xf32>, vector<32x128xf32> -> vector<32x128xf32>
    %42 = vector.broadcast %40 : vector<32x1xf32> to vector<32x128xf32>
    %43 = arith.addf %41, %42 : vector<32x128xf32>
    %cst_35 = arith.constant 0.000000e+00 : f32
    %44 = vector.broadcast %cst_35 : f32 to vector<32x128xf32>
    %45 = arith.maximumf %43, %44 : vector<32x128xf32>
    %c5 = arith.constant 5 : index
    %c0_36 = arith.constant 0 : index
    %c0_37 = arith.constant 0 : index
    %46 = vector.load %arg2[%c5, %c0_36, %c0_37] : memref<8x32x32xf32, #tpu.memory_space<vmem>>, vector<1x32x32xf32>
    %47 = vector.shape_cast %46 : vector<1x32x32xf32> to vector<32x32xf32>
    %c5_38 = arith.constant 5 : index
    %c0_39 = arith.constant 0 : index
    %c0_40 = arith.constant 0 : index
    %48 = vector.load %arg3[%c5_38, %c0_39, %c0_40] : memref<8x32x1xf32, #tpu.memory_space<vmem>>, vector<1x32x1xf32>
    %49 = vector.shape_cast %48 : vector<1x32x1xf32> to vector<32x1xf32>
    %cst_41 = arith.constant dense<0.000000e+00> : vector<32x128xf32>
    %50 = tpu.matmul %47, %45, %cst_41 {dimension_numbers = #tpu.dot_dimension_numbers<[1], [0], [0], [1], [0, 0, 1, 1], [], []>} : vector<32x32xf32>, vector<32x128xf32>, vector<32x128xf32> -> vector<32x128xf32>
    %51 = vector.broadcast %49 : vector<32x1xf32> to vector<32x128xf32>
    %52 = arith.addf %50, %51 : vector<32x128xf32>
    %cst_42 = arith.constant 0.000000e+00 : f32
    %53 = vector.broadcast %cst_42 : f32 to vector<32x128xf32>
    %54 = arith.maximumf %52, %53 : vector<32x128xf32>
    %c6 = arith.constant 6 : index
    %c0_43 = arith.constant 0 : index
    %c0_44 = arith.constant 0 : index
    %55 = vector.load %arg2[%c6, %c0_43, %c0_44] : memref<8x32x32xf32, #tpu.memory_space<vmem>>, vector<1x32x32xf32>
    %56 = vector.shape_cast %55 : vector<1x32x32xf32> to vector<32x32xf32>
    %c6_45 = arith.constant 6 : index
    %c0_46 = arith.constant 0 : index
    %c0_47 = arith.constant 0 : index
    %57 = vector.load %arg3[%c6_45, %c0_46, %c0_47] : memref<8x32x1xf32, #tpu.memory_space<vmem>>, vector<1x32x1xf32>
    %58 = vector.shape_cast %57 : vector<1x32x1xf32> to vector<32x1xf32>
    %cst_48 = arith.constant dense<0.000000e+00> : vector<32x128xf32>
    %59 = tpu.matmul %56, %54, %cst_48 {dimension_numbers = #tpu.dot_dimension_numbers<[1], [0], [0], [1], [0, 0, 1, 1], [], []>} : vector<32x32xf32>, vector<32x128xf32>, vector<32x128xf32> -> vector<32x128xf32>
    %60 = vector.broadcast %58 : vector<32x1xf32> to vector<32x128xf32>
    %61 = arith.addf %59, %60 : vector<32x128xf32>
    %cst_49 = arith.constant 0.000000e+00 : f32
    %62 = vector.broadcast %cst_49 : f32 to vector<32x128xf32>
    %63 = arith.maximumf %61, %62 : vector<32x128xf32>
    %c7 = arith.constant 7 : index
    %c0_50 = arith.constant 0 : index
    %c0_51 = arith.constant 0 : index
    %64 = vector.load %arg2[%c7, %c0_50, %c0_51] : memref<8x32x32xf32, #tpu.memory_space<vmem>>, vector<1x32x32xf32>
    %65 = vector.shape_cast %64 : vector<1x32x32xf32> to vector<32x32xf32>
    %c7_52 = arith.constant 7 : index
    %c0_53 = arith.constant 0 : index
    %c0_54 = arith.constant 0 : index
    %66 = vector.load %arg3[%c7_52, %c0_53, %c0_54] : memref<8x32x1xf32, #tpu.memory_space<vmem>>, vector<1x32x1xf32>
    %67 = vector.shape_cast %66 : vector<1x32x1xf32> to vector<32x1xf32>
    %cst_55 = arith.constant dense<0.000000e+00> : vector<32x128xf32>
    %68 = tpu.matmul %65, %63, %cst_55 {dimension_numbers = #tpu.dot_dimension_numbers<[1], [0], [0], [1], [0, 0, 1, 1], [], []>} : vector<32x32xf32>, vector<32x128xf32>, vector<32x128xf32> -> vector<32x128xf32>
    %69 = vector.broadcast %67 : vector<32x1xf32> to vector<32x128xf32>
    %70 = arith.addf %68, %69 : vector<32x128xf32>
    %cst_56 = arith.constant 0.000000e+00 : f32
    %71 = vector.broadcast %cst_56 : f32 to vector<32x128xf32>
    %72 = arith.maximumf %70, %71 : vector<32x128xf32>
    %c0_57 = arith.constant 0 : index
    %c0_58 = arith.constant 0 : index
    %73 = vector.load %arg4[%c0_57, %c0_58] : memref<32x1xf32, #tpu.memory_space<vmem>>, vector<32x1xf32>
    %74 = vector.broadcast %73 : vector<32x1xf32> to vector<32x128xf32>
    %75 = arith.mulf %74, %72 : vector<32x128xf32>
    %cst_59 = arith.constant dense<0.000000e+00> : vector<128xf32>
    %76 = vector.multi_reduction <add>, %75, %cst_59 [0] : vector<32x128xf32> to vector<128xf32>
    %77 = vector.shape_cast %76 : vector<128xf32> to vector<1x128xf32>
    %c0_60 = arith.constant 0 : index
    %c0_61 = arith.constant 0 : index
    %78 = vector.load %arg5[%c0_60, %c0_61] : memref<1x1xf32, #tpu.memory_space<vmem>>, vector<1x1xf32>
    %79 = vector.broadcast %78 : vector<1x1xf32> to vector<1x128xf32>
    %80 = arith.addf %77, %79 : vector<1x128xf32>
    %c0_62 = arith.constant 0 : index
    %c0_63 = arith.constant 0 : index
    %81 = vector.load %arg6[%c0_62, %c0_63] : memref<1x128xf32, #tpu.memory_space<vmem>>, vector<1x128xf32>
    tpu.vector_store %arg6[%c0_62, %c0_63], %80 {strides = array<i32>} : memref<1x128xf32, #tpu.memory_space<vmem>>, vector<1x128xf32>,
    return
  }
  func.func @transform_0(%arg0: i32) -> (i32, i32) {
    %c0_i32 = arith.constant 0 : i32
    %c0_i32_0 = arith.constant 0 : i32
    return %c0_i32, %arg0 : i32, i32
  }
  func.func @transform_1(%arg0: i32) -> (i32, i32, i32) {
    %c0_i32 = arith.constant 0 : i32
    %c0_i32_0 = arith.constant 0 : i32
    %c0_i32_1 = arith.constant 0 : i32
    %c0_i32_2 = arith.constant 0 : i32
    return %c0_i32, %c0_i32_0, %c0_i32_1 : i32, i32, i32
  }
  func.func @transform_2(%arg0: i32) -> (i32, i32, i32) {
    %c0_i32 = arith.constant 0 : i32
    %c0_i32_0 = arith.constant 0 : i32
    %c0_i32_1 = arith.constant 0 : i32
    %c0_i32_2 = arith.constant 0 : i32
    return %c0_i32, %c0_i32_0, %c0_i32_1 : i32, i32, i32
  }
  func.func @transform_3(%arg0: i32) -> (i32, i32) {
    %c0_i32 = arith.constant 0 : i32
    %c0_i32_0 = arith.constant 0 : i32
    %c0_i32_1 = arith.constant 0 : i32
    return %c0_i32, %c0_i32_0 : i32, i32
  }
  func.func @transform_4(%arg0: i32) -> (i32, i32) {
    %c0_i32 = arith.constant 0 : i32
    %c0_i32_0 = arith.constant 0 : i32
    %c0_i32_1 = arith.constant 0 : i32
    return %c0_i32, %c0_i32_0 : i32, i32
  }
  func.func @transform_5(%arg0: i32) -> (i32, i32) {
    %c0_i32 = arith.constant 0 : i32
    %c0_i32_0 = arith.constant 0 : i32
    return %c0_i32, %arg0 : i32, i32
  }
}

</mosaic_0001>

<llo_original>
// kernel: forward.1
$region0: #{forward.1}
  #allocation0 [shape = 'u32[]', space=smem, size = 0x4, offset = 0x4, fixed_abs, tag = 'smem constant byte address 0x4 - core index']
  #allocation1 [shape = 'u32[72,128]{1,0:T(1,128)}', space=vmem, size = 0x9000, scoped, tag = 'internal scratch']
  #allocation2 [shape = 'f32[1,1]{1,0:T(1,128)S(1)}', space=vmem, size = 0x200, scoped, tag = 'scoped memory for forward.1']
  %s0 = inlined_call_operand.vmem [shape: f32[32,128], index: 0, kind: input, shape index: {}]
  %s1 = inlined_call_operand.hbm [shape: f32[8,32,32], index: 1, kind: input, shape index: {}]
  %s2 = inlined_call_operand.hbm [shape: f32[8,32,1], index: 2, kind: input, shape index: {}]
  %s3 = inlined_call_operand.vmem [shape: f32[32,1], index: 3, kind: input, shape index: {}]
  %s4 = inlined_call_operand.<no memory space> [shape: f32[1,1], index: 4, kind: input, shape index: {}]
  %s5 = inlined_call_operand.vmem [shape: f32[1,128], index: 5, kind: output, shape index: {}]
  %s6 = sld [smem:[#allocation0]]
  $region38: #{forward.1} parent=0
    _
  %s8 = ssub.s32 1, %s6
  %s9 = scalar_select 0, %s8, %s6
  %v10 = vstv %s4
  %11 = vst [vmem:[#allocation2] sm:$0x1] %v10
  $region1: #{forward.1} parent=0
    #allocation3 [shape = 'u8[131072]{0}', space=vmem, size = 0x20000, scoped, tag = 'input window, operand 1, single buffered']
    #allocation4 [shape = 's32[1]{0}', space=sflag, size = 0x4, scoped, tag = 'scoped memory for forward.1']
    #allocation5 [shape = 'u8[131072]{0}', space=vmem, size = 0x20000, scoped, tag = 'input window, operand 2, single buffered']
    #allocation6 [shape = 's32[1]{0}', space=sflag, size = 0x4, scoped, tag = 'scoped memory for forward.1']
    %12 = vsyncpa [#allocation4], 0
    %13 = vsyncpa [#allocation6], 0
    // Predicated region
    $region2: #{forward.1} parent=1 // pred_check
      _
    $region3: #{forward.1} parent=1 // pred_check_branch
      %15 = sbr.rel (0) target = $region5
    $region4: #{forward.1} parent=1 // pred_region
      _
    $region5: #{forward.1} parent=1 // pred_fallthru
      _
    // Predicated region
    $region6: #{forward.1} parent=1 // pred_check
      _
    $region7: #{forward.1} parent=1 // pred_check_branch
      %17 = sbr.rel (0) target = $region9
    $region8: #{forward.1} parent=1 // pred_region
      %19 = vsyncadd [#allocation4], 0
      %s20 = sshll.u32 %s1, 4
      %s21 = int_to_ptr.hbm [resolvable:$true] %s20
      %s22 = sshll.u32 [#allocation3], 4
      %s23 = int_to_ptr.vmem [resolvable:$true] %s22
      %28 = dma.hbm_to_vmem [thread:$0]  %s21, 4096, %s23, [#allocation4], 128, 128, 8
    $region9: #{forward.1} parent=1 // pred_fallthru
      _
    // Predicated region
    $region10: #{forward.1} parent=1 // pred_check
      _
    $region11: #{forward.1} parent=1 // pred_check_branch
      %30 = sbr.rel (0) target = $region13
    $region12: #{forward.1} parent=1 // pred_region
      %32 = vsyncadd [#allocation6], 0
      %s33 = sshll.u32 %s2, 4
      %s34 = int_to_ptr.hbm [resolvable:$true] %s33
      %s35 = sshll.u32 [#allocation5], 4
      %s36 = int_to_ptr.vmem [resolvable:$true] %s35
      %41 = dma.hbm_to_vmem [thread:$0]  %s34, 4096, %s36, [#allocation6], 128, 128, 8
    $region13: #{forward.1} parent=1 // pred_fallthru
      _
    // Predicated region
    $region14: #{forward.1} parent=1 // pred_check
      _
    $region15: #{forward.1} parent=1 // pred_check_branch
      %43 = sbr.rel (0) target = $region17
    $region16: #{forward.1} parent=1 // pred_region
      _
    $region17: #{forward.1} parent=1 // pred_fallthru
      _
    // Predicated region
    $region18: #{forward.1} parent=1 // pred_check
      _
    $region19: #{forward.1} parent=1 // pred_check_branch
      %45 = sbr.rel (0) target = $region21
    $region20: #{forward.1} parent=1 // pred_region
      _
    $region21: #{forward.1} parent=1 // pred_fallthru
      _
    // Predicated region
    $region22: #{forward.1} parent=1 // pred_check
      _
    $region23: #{forward.1} parent=1 // pred_check_branch
      %47 = sbr.rel (0) target = $region25
    $region24: #{forward.1} parent=1 // pred_region
      %49 = dma.done [#allocation4], 4096
    $region25: #{forward.1} parent=1 // pred_fallthru
      _
    // Predicated region
    $region26: #{forward.1} parent=1 // pred_check
      _
    $region27: #{forward.1} parent=1 // pred_check_branch
      %51 = sbr.rel (0) target = $region29
    $region28: #{forward.1} parent=1 // pred_region
      %53 = dma.done [#allocation6], 4096
    $region29: #{forward.1} parent=1 // pred_fallthru
      _
    %v54 = vld [vmem:[%s0] sm:$0xff]
    %v55 = vld [vmem:[%s0 + $0x8] sm:$0xff]
    %v56 = vld [vmem:[%s0 + $0x10] sm:$0xff]
    %v57 = vld [vmem:[%s0 + $0x18] sm:$0xff]
    %v58 = vld [vmem:[#allocation3] sm:$0xff]
    %v59 = vld [vmem:[#allocation3 + $0x8] sm:$0xff]
    %v60 = vld [vmem:[#allocation3 + $0x10] sm:$0xff]
    %v61 = vld [vmem:[#allocation3 + $0x18] sm:$0xff]
    %v62 = vld [vmem:[#allocation5] sm:$0xff]
    %v63 = vld [vmem:[#allocation5 + $0x8] sm:$0xff]
    %v64 = vld [vmem:[#allocation5 + $0x10] sm:$0xff]
    %v65 = vld [vmem:[#allocation5 + $0x18] sm:$0xff]
    %67 = vset.pattern.permute.xlu0 0
    %68 = vperm.xlu0 %67, %v62
    %v69 = vpop.permute.xlu0 %68
    %72 = vset.pattern.permute.xlu0 0
    %73 = vperm.xlu0 %72, %v63
    %v74 = vpop.permute.xlu0 %73
    %77 = vset.pattern.permute.xlu0 0
    %78 = vperm.xlu0 %77, %v64
    %v79 = vpop.permute.xlu0 %78
    %82 = vset.pattern.permute.xlu0 0
    %83 = vperm.xlu0 %82, %v65
    %v84 = vpop.permute.xlu0 %83
    %vm86 = vcmask 261120
    %v88 = vsel %vm86, %v58, 0
    %v91 = vsel %vm86, %v59, 0
    %v94 = vsel %vm86, %v60, 0
    %v97 = vsel %vm86, %v61, 0
    %99 = vmatpush.msra.mxu0 0.0
    %100 = vmatpush.msra.mxu0 0.0
    %101 = vmatpush.msra.mxu0 0.0
    %102 = vmatpush.msra.mxu0 0.0
    %103 = vmatpush.msra.mxu0 0.0
    %104 = vmatpush.msra.mxu0 0.0
    %105 = vmatpush.msra.mxu0 0.0
    %106 = vmatpush.msra.mxu0 0.0
    %107 = vmatpush.msra.mxu0 0.0
    %108 = vmatpush.msra.mxu0 0.0
    %109 = vmatpush.msra.mxu0 0.0
    %110 = vmatpush.msra.mxu0 0.0
    %111 = vmatpush.msra.mxu0 %v57
    %112 = vmatpush.msra.mxu0 %v56
    %113 = vmatpush.msra.mxu0 %v55
    %114 = vmatpush.msra.mxu0 %v54
    %115 = vmatmul.f32.gmra.mxu0 %v88
    %v116 = vpop.f32.mrf.mxu0
    %v117 = vadd.f32 %v69, %v116
    %118 = vmatmul.f32.gmra.mxu0 %v91
    %v119 = vpop.f32.mrf.mxu0
    %v120 = vadd.f32 %v74, %v119
    %121 = vmatmul.f32.gmra.mxu0 %v94
    %v122 = vpop.f32.mrf.mxu0
    %v123 = vadd.f32 %v79, %v122
    %124 = vmatmul.f32.gmra.mxu0 %v97
    %v125 = vpop.f32.mrf.mxu0
    %v126 = vadd.f32 %v84, %v125
    %127 = vdwg.mxu0
    %v128 = vmax.f32 %v117, 0.0
    %v129 = vmax.f32 %v120, 0.0
    %v130 = vmax.f32 %v123, 0.0
    %v131 = vmax.f32 %v126, 0.0
    %s132 = scalar_lea.vmem [#allocation3], 32
    %v133 = vld [vmem:[%s132] sm:$0xff]
    %v134 = vld [vmem:[%s132 + $0x8] sm:$0xff]
    %v135 = vld [vmem:[%s132 + $0x10] sm:$0xff]
    %v136 = vld [vmem:[%s132 + $0x18] sm:$0xff]
    %s137 = scalar_lea.vmem [#allocation5], 32
    %v138 = vld [vmem:[%s137] sm:$0xff]
    %v139 = vld [vmem:[%s137 + $0x8] sm:$0xff]
    %v140 = vld [vmem:[%s137 + $0x10] sm:$0xff]
    %v141 = vld [vmem:[%s137 + $0x18] sm:$0xff]
    %143 = vset.pattern.permute.xlu0 0
    %144 = vperm.xlu0 %143, %v138
    %v145 = vpop.permute.xlu0 %144
    %148 = vset.pattern.permute.xlu0 0
    %149 = vperm.xlu0 %148, %v139
    %v150 = vpop.permute.xlu0 %149
    %153 = vset.pattern.permute.xlu0 0
    %154 = vperm.xlu0 %153, %v140
    %v155 = vpop.permute.xlu0 %154
    %158 = vset.pattern.permute.xlu0 0
    %159 = vperm.xlu0 %158, %v141
    %v160 = vpop.permute.xlu0 %159
    %v163 = vsel %vm86, %v133, 0
    %v166 = vsel %vm86, %v134, 0
    %v169 = vsel %vm86, %v135, 0
    %v172 = vsel %vm86, %v136, 0
    %174 = vmatpush.msra.mxu0 0.0
    %175 = vmatpush.msra.mxu0 0.0
    %176 = vmatpush.msra.mxu0 0.0
    %177 = vmatpush.msra.mxu0 0.0
    %178 = vmatpush.msra.mxu0 0.0
    %179 = vmatpush.msra.mxu0 0.0
    %180 = vmatpush.msra.mxu0 0.0
    %181 = vmatpush.msra.mxu0 0.0
    %182 = vmatpush.msra.mxu0 0.0
    %183 = vmatpush.msra.mxu0 0.0
    %184 = vmatpush.msra.mxu0 0.0
    %185 = vmatpush.msra.mxu0 0.0
    %186 = vmatpush.msra.mxu0 %v131
    %187 = vmatpush.msra.mxu0 %v130
    %188 = vmatpush.msra.mxu0 %v129
    %189 = vmatpush.msra.mxu0 %v128
    %190 = vmatmul.f32.gmra.mxu0 %v163
    %v191 = vpop.f32.mrf.mxu0
    %v192 = vadd.f32 %v145, %v191
    %193 = vmatmul.f32.gmra.mxu0 %v166
    %v194 = vpop.f32.mrf.mxu0
    %v195 = vadd.f32 %v150, %v194
    %196 = vmatmul.f32.gmra.mxu0 %v169
    %v197 = vpop.f32.mrf.mxu0
    %v198 = vadd.f32 %v155, %v197
    %199 = vmatmul.f32.gmra.mxu0 %v172
    %v200 = vpop.f32.mrf.mxu0
    %v201 = vadd.f32 %v160, %v200
    %202 = vdwg.mxu0
    %v203 = vmax.f32 %v192, 0.0
    %v204 = vmax.f32 %v195, 0.0
    %v205 = vmax.f32 %v198, 0.0
    %v206 = vmax.f32 %v201, 0.0
    %s207 = scalar_lea.vmem [#allocation3], 64
    %v208 = vld [vmem:[%s207] sm:$0xff]
    %v209 = vld [vmem:[%s207 + $0x8] sm:$0xff]
    %v210 = vld [vmem:[%s207 + $0x10] sm:$0xff]
    %v211 = vld [vmem:[%s207 + $0x18] sm:$0xff]
    %s212 = scalar_lea.vmem [#allocation5], 64
    %v213 = vld [vmem:[%s212] sm:$0xff]
    %v214 = vld [vmem:[%s212 + $0x8] sm:$0xff]
    %v215 = vld [vmem:[%s212 + $0x10] sm:$0xff]
    %v216 = vld [vmem:[%s212 + $0x18] sm:$0xff]
    %218 = vset.pattern.permute.xlu0 0
    %219 = vperm.xlu0 %218, %v213
    %v220 = vpop.permute.xlu0 %219
    %223 = vset.pattern.permute.xlu0 0
    %224 = vperm.xlu0 %223, %v214
    %v225 = vpop.permute.xlu0 %224
    %228 = vset.pattern.permute.xlu0 0
    %229 = vperm.xlu0 %228, %v215
    %v230 = vpop.permute.xlu0 %229
    %233 = vset.pattern.permute.xlu0 0
    %234 = vperm.xlu0 %233, %v216
    %v235 = vpop.permute.xlu0 %234
    %v238 = vsel %vm86, %v208, 0
    %v241 = vsel %vm86, %v209, 0
    %v244 = vsel %vm86, %v210, 0
    %v247 = vsel %vm86, %v211, 0
    %249 = vmatpush.msra.mxu0 0.0
    %250 = vmatpush.msra.mxu0 0.0
    %251 = vmatpush.msra.mxu0 0.0
    %252 = vmatpush.msra.mxu0 0.0
    %253 = vmatpush.msra.mxu0 0.0
    %254 = vmatpush.msra.mxu0 0.0
    %255 = vmatpush.msra.mxu0 0.0
    %256 = vmatpush.msra.mxu0 0.0
    %257 = vmatpush.msra.mxu0 0.0
    %258 = vmatpush.msra.mxu0 0.0
    %259 = vmatpush.msra.mxu0 0.0
    %260 = vmatpush.msra.mxu0 0.0
    %261 = vmatpush.msra.mxu0 %v206
    %262 = vmatpush.msra.mxu0 %v205
    %263 = vmatpush.msra.mxu0 %v204
    %264 = vmatpush.msra.mxu0 %v203
    %265 = vmatmul.f32.gmra.mxu0 %v238
    %v266 = vpop.f32.mrf.mxu0
    %v267 = vadd.f32 %v220, %v266
    %268 = vmatmul.f32.gmra.mxu0 %v241
    %v269 = vpop.f32.mrf.mxu0
    %v270 = vadd.f32 %v225, %v269
    %271 = vmatmul.f32.gmra.mxu0 %v244
    %v272 = vpop.f32.mrf.mxu0
    %v273 = vadd.f32 %v230, %v272
    %274 = vmatmul.f32.gmra.mxu0 %v247
    %v275 = vpop.f32.mrf.mxu0
    %v276 = vadd.f32 %v235, %v275
    %277 = vdwg.mxu0
    %v278 = vmax.f32 %v267, 0.0
    %v279 = vmax.f32 %v270, 0.0
    %v280 = vmax.f32 %v273, 0.0
    %v281 = vmax.f32 %v276, 0.0
    %s282 = scalar_lea.vmem [#allocation3], 96
    %v283 = vld [vmem:[%s282] sm:$0xff]
    %v284 = vld [vmem:[%s282 + $0x8] sm:$0xff]
    %v285 = vld [vmem:[%s282 + $0x10] sm:$0xff]
    %v286 = vld [vmem:[%s282 + $0x18] sm:$0xff]
    %s287 = scalar_lea.vmem [#allocation5], 96
    %v288 = vld [vmem:[%s287] sm:$0xff]
    %v289 = vld [vmem:[%s287 + $0x8] sm:$0xff]
    %v290 = vld [vmem:[%s287 + $0x10] sm:$0xff]
    %v291 = vld [vmem:[%s287 + $0x18] sm:$0xff]
    %293 = vset.pattern.permute.xlu0 0
    %294 = vperm.xlu0 %293, %v288
    %v295 = vpop.permute.xlu0 %294
    %298 = vset.pattern.permute.xlu0 0
    %299 = vperm.xlu0 %298, %v289
    %v300 = vpop.permute.xlu0 %299
    %303 = vset.pattern.permute.xlu0 0
    %304 = vperm.xlu0 %303, %v290
    %v305 = vpop.permute.xlu0 %304
    %308 = vset.pattern.permute.xlu0 0
    %309 = vperm.xlu0 %308, %v291
    %v310 = vpop.permute.xlu0 %309
    %v313 = vsel %vm86, %v283, 0
    %v316 = vsel %vm86, %v284, 0
    %v319 = vsel %vm86, %v285, 0
    %v322 = vsel %vm86, %v286, 0
    %324 = vmatpush.msra.mxu0 0.0
    %325 = vmatpush.msra.mxu0 0.0
    %326 = vmatpush.msra.mxu0 0.0
    %327 = vmatpush.msra.mxu0 0.0
    %328 = vmatpush.msra.mxu0 0.0
    %329 = vmatpush.msra.mxu0 0.0
    %330 = vmatpush.msra.mxu0 0.0
    %331 = vmatpush.msra.mxu0 0.0
    %332 = vmatpush.msra.mxu0 0.0
    %333 = vmatpush.msra.mxu0 0.0
    %334 = vmatpush.msra.mxu0 0.0
    %335 = vmatpush.msra.mxu0 0.0
    %336 = vmatpush.msra.mxu0 %v281
    %337 = vmatpush.msra.mxu0 %v280
    %338 = vmatpush.msra.mxu0 %v279
    %339 = vmatpush.msra.mxu0 %v278
    %340 = vmatmul.f32.gmra.mxu0 %v313
    %v341 = vpop.f32.mrf.mxu0
    %v342 = vadd.f32 %v295, %v341
    %343 = vmatmul.f32.gmra.mxu0 %v316
    %v344 = vpop.f32.mrf.mxu0
    %v345 = vadd.f32 %v300, %v344
    %346 = vmatmul.f32.gmra.mxu0 %v319
    %v347 = vpop.f32.mrf.mxu0
    %v348 = vadd.f32 %v305, %v347
    %349 = vmatmul.f32.gmra.mxu0 %v322
    %v350 = vpop.f32.mrf.mxu0
    %v351 = vadd.f32 %v310, %v350
    %352 = vdwg.mxu0
    %v353 = vmax.f32 %v342, 0.0
    %v354 = vmax.f32 %v345, 0.0
    %v355 = vmax.f32 %v348, 0.0
    %v356 = vmax.f32 %v351, 0.0
    %s357 = scalar_lea.vmem [#allocation3], 128
    %v358 = vld [vmem:[%s357] sm:$0xff]
    %v359 = vld [vmem:[%s357 + $0x8] sm:$0xff]
    %v360 = vld [vmem:[%s357 + $0x10] sm:$0xff]
    %v361 = vld [vmem:[%s357 + $0x18] sm:$0xff]
    %s362 = scalar_lea.vmem [#allocation5], 128
    %v363 = vld [vmem:[%s362] sm:$0xff]
    %v364 = vld [vmem:[%s362 + $0x8] sm:$0xff]
    %v365 = vld [vmem:[%s362 + $0x10] sm:$0xff]
    %v366 = vld [vmem:[%s362 + $0x18] sm:$0xff]
    %368 = vset.pattern.permute.xlu0 0
    %369 = vperm.xlu0 %368, %v363
    %v370 = vpop.permute.xlu0 %369
    %373 = vset.pattern.permute.xlu0 0
    %374 = vperm.xlu0 %373, %v364
    %v375 = vpop.permute.xlu0 %374
    %378 = vset.pattern.permute.xlu0 0
    %379 = vperm.xlu0 %378, %v365
    %v380 = vpop.permute.xlu0 %379
    %383 = vset.pattern.permute.xlu0 0
    %384 = vperm.xlu0 %383, %v366
    %v385 = vpop.permute.xlu0 %384
    %v388 = vsel %vm86, %v358, 0
    %v391 = vsel %vm86, %v359, 0
    %v394 = vsel %vm86, %v360, 0
    %v397 = vsel %vm86, %v361, 0
    %399 = vmatpush.msra.mxu0 0.0
    %400 = vmatpush.msra.mxu0 0.0
    %401 = vmatpush.msra.mxu0 0.0
    %402 = vmatpush.msra.mxu0 0.0
    %403 = vmatpush.msra.mxu0 0.0
    %404 = vmatpush.msra.mxu0 0.0
    %405 = vmatpush.msra.mxu0 0.0
    %406 = vmatpush.msra.mxu0 0.0
    %407 = vmatpush.msra.mxu0 0.0
    %408 = vmatpush.msra.mxu0 0.0
    %409 = vmatpush.msra.mxu0 0.0
    %410 = vmatpush.msra.mxu0 0.0
    %411 = vmatpush.msra.mxu0 %v356
    %412 = vmatpush.msra.mxu0 %v355
    %413 = vmatpush.msra.mxu0 %v354
    %414 = vmatpush.msra.mxu0 %v353
    %415 = vmatmul.f32.gmra.mxu0 %v388
    %v416 = vpop.f32.mrf.mxu0
    %v417 = vadd.f32 %v370, %v416
    %418 = vmatmul.f32.gmra.mxu0 %v391
    %v419 = vpop.f32.mrf.mxu0
    %v420 = vadd.f32 %v375, %v419
    %421 = vmatmul.f32.gmra.mxu0 %v394
    %v422 = vpop.f32.mrf.mxu0
    %v423 = vadd.f32 %v380, %v422
    %424 = vmatmul.f32.gmra.mxu0 %v397
    %v425 = vpop.f32.mrf.mxu0
    %v426 = vadd.f32 %v385, %v425
    %427 = vdwg.mxu0
    %v428 = vmax.f32 %v417, 0.0
    %v429 = vmax.f32 %v420, 0.0
    %v430 = vmax.f32 %v423, 0.0
    %v431 = vmax.f32 %v426, 0.0
    %s432 = scalar_lea.vmem [#allocation3], 160
    %v433 = vld [vmem:[%s432] sm:$0xff]
    %v434 = vld [vmem:[%s432 + $0x8] sm:$0xff]
    %v435 = vld [vmem:[%s432 + $0x10] sm:$0xff]
    %v436 = vld [vmem:[%s432 + $0x18] sm:$0xff]
    %s437 = scalar_lea.vmem [#allocation5], 160
    %v438 = vld [vmem:[%s437] sm:$0xff]
    %v439 = vld [vmem:[%s437 + $0x8] sm:$0xff]
    %v440 = vld [vmem:[%s437 + $0x10] sm:$0xff]
    %v441 = vld [vmem:[%s437 + $0x18] sm:$0xff]
    %443 = vset.pattern.permute.xlu0 0
    %444 = vperm.xlu0 %443, %v438
    %v445 = vpop.permute.xlu0 %444
    %448 = vset.pattern.permute.xlu0 0
    %449 = vperm.xlu0 %448, %v439
    %v450 = vpop.permute.xlu0 %449
    %453 = vset.pattern.permute.xlu0 0
    %454 = vperm.xlu0 %453, %v440
    %v455 = vpop.permute.xlu0 %454
    %458 = vset.pattern.permute.xlu0 0
    %459 = vperm.xlu0 %458, %v441
    %v460 = vpop.permute.xlu0 %459
    %v463 = vsel %vm86, %v433, 0
    %v466 = vsel %vm86, %v434, 0
    %v469 = vsel %vm86, %v435, 0
    %v472 = vsel %vm86, %v436, 0
    %474 = vmatpush.msra.mxu0 0.0
    %475 = vmatpush.msra.mxu0 0.0
    %476 = vmatpush.msra.mxu0 0.0
    %477 = vmatpush.msra.mxu0 0.0
    %478 = vmatpush.msra.mxu0 0.0
    %479 = vmatpush.msra.mxu0 0.0
    %480 = vmatpush.msra.mxu0 0.0
    %481 = vmatpush.msra.mxu0 0.0
    %482 = vmatpush.msra.mxu0 0.0
    %483 = vmatpush.msra.mxu0 0.0
    %484 = vmatpush.msra.mxu0 0.0
    %485 = vmatpush.msra.mxu0 0.0
    %486 = vmatpush.msra.mxu0 %v431
    %487 = vmatpush.msra.mxu0 %v430
    %488 = vmatpush.msra.mxu0 %v429
    %489 = vmatpush.msra.mxu0 %v428
    %490 = vmatmul.f32.gmra.mxu0 %v463
    %v491 = vpop.f32.mrf.mxu0
    %v492 = vadd.f32 %v445, %v491
    %493 = vmatmul.f32.gmra.mxu0 %v466
    %v494 = vpop.f32.mrf.mxu0
    %v495 = vadd.f32 %v450, %v494
    %496 = vmatmul.f32.gmra.mxu0 %v469
    %v497 = vpop.f32.mrf.mxu0
    %v498 = vadd.f32 %v455, %v497
    %499 = vmatmul.f32.gmra.mxu0 %v472
    %v500 = vpop.f32.mrf.mxu0
    %v501 = vadd.f32 %v460, %v500
    %502 = vdwg.mxu0
    %v503 = vmax.f32 %v492, 0.0
    %v504 = vmax.f32 %v495, 0.0
    %v505 = vmax.f32 %v498, 0.0
    %v506 = vmax.f32 %v501, 0.0
    %s507 = scalar_lea.vmem [#allocation3], 192
    %v508 = vld [vmem:[%s507] sm:$0xff]
    %v509 = vld [vmem:[%s507 + $0x8] sm:$0xff]
    %v510 = vld [vmem:[%s507 + $0x10] sm:$0xff]
    %v511 = vld [vmem:[%s507 + $0x18] sm:$0xff]
    %s512 = scalar_lea.vmem [#allocation5], 192
    %v513 = vld [vmem:[%s512] sm:$0xff]
    %v514 = vld [vmem:[%s512 + $0x8] sm:$0xff]
    %v515 = vld [vmem:[%s512 + $0x10] sm:$0xff]
    %v516 = vld [vmem:[%s512 + $0x18] sm:$0xff]
    %518 = vset.pattern.permute.xlu0 0
    %519 = vperm.xlu0 %518, %v513
    %v520 = vpop.permute.xlu0 %519
    %523 = vset.pattern.permute.xlu0 0
    %524 = vperm.xlu0 %523, %v514
    %v525 = vpop.permute.xlu0 %524
    %528 = vset.pattern.permute.xlu0 0
    %529 = vperm.xlu0 %528, %v515
    %v530 = vpop.permute.xlu0 %529
    %533 = vset.pattern.permute.xlu0 0
    %534 = vperm.xlu0 %533, %v516
    %v535 = vpop.permute.xlu0 %534
    %v538 = vsel %vm86, %v508, 0
    %v541 = vsel %vm86, %v509, 0
    %v544 = vsel %vm86, %v510, 0
    %v547 = vsel %vm86, %v511, 0
    %549 = vmatpush.msra.mxu0 0.0
    %550 = vmatpush.msra.mxu0 0.0
    %551 = vmatpush.msra.mxu0 0.0
    %552 = vmatpush.msra.mxu0 0.0
    %553 = vmatpush.msra.mxu0 0.0
    %554 = vmatpush.msra.mxu0 0.0
    %555 = vmatpush.msra.mxu0 0.0
    %556 = vmatpush.msra.mxu0 0.0
    %557 = vmatpush.msra.mxu0 0.0
    %558 = vmatpush.msra.mxu0 0.0
    %559 = vmatpush.msra.mxu0 0.0
    %560 = vmatpush.msra.mxu0 0.0
    %561 = vmatpush.msra.mxu0 %v506
    %562 = vmatpush.msra.mxu0 %v505
    %563 = vmatpush.msra.mxu0 %v504
    %564 = vmatpush.msra.mxu0 %v503
    %565 = vmatmul.f32.gmra.mxu0 %v538
    %v566 = vpop.f32.mrf.mxu0
    %v567 = vadd.f32 %v520, %v566
    %568 = vmatmul.f32.gmra.mxu0 %v541
    %v569 = vpop.f32.mrf.mxu0
    %v570 = vadd.f32 %v525, %v569
    %571 = vmatmul.f32.gmra.mxu0 %v544
    %v572 = vpop.f32.mrf.mxu0
    %v573 = vadd.f32 %v530, %v572
    %574 = vmatmul.f32.gmra.mxu0 %v547
    %v575 = vpop.f32.mrf.mxu0
    %v576 = vadd.f32 %v535, %v575
    %577 = vdwg.mxu0
    %v578 = vmax.f32 %v567, 0.0
    %v579 = vmax.f32 %v570, 0.0
    %v580 = vmax.f32 %v573, 0.0
    %v581 = vmax.f32 %v576, 0.0
    %s582 = scalar_lea.vmem [#allocation3], 224
    %v583 = vld [vmem:[%s582] sm:$0xff]
    %v584 = vld [vmem:[%s582 + $0x8] sm:$0xff]
    %v585 = vld [vmem:[%s582 + $0x10] sm:$0xff]
    %v586 = vld [vmem:[%s582 + $0x18] sm:$0xff]
    %s587 = scalar_lea.vmem [#allocation5], 224
    %v588 = vld [vmem:[%s587] sm:$0xff]
    %v589 = vld [vmem:[%s587 + $0x8] sm:$0xff]
    %v590 = vld [vmem:[%s587 + $0x10] sm:$0xff]
    %v591 = vld [vmem:[%s587 + $0x18] sm:$0xff]
    %593 = vset.pattern.permute.xlu0 0
    %594 = vperm.xlu0 %593, %v588
    %v595 = vpop.permute.xlu0 %594
    %598 = vset.pattern.permute.xlu0 0
    %599 = vperm.xlu0 %598, %v589
    %v600 = vpop.permute.xlu0 %599
    %603 = vset.pattern.permute.xlu0 0
    %604 = vperm.xlu0 %603, %v590
    %v605 = vpop.permute.xlu0 %604
    %608 = vset.pattern.permute.xlu0 0
    %609 = vperm.xlu0 %608, %v591
    %v610 = vpop.permute.xlu0 %609
    %v613 = vsel %vm86, %v583, 0
    %v616 = vsel %vm86, %v584, 0
    %v619 = vsel %vm86, %v585, 0
    %v622 = vsel %vm86, %v586, 0
    %624 = vmatpush.msra.mxu0 0.0
    %625 = vmatpush.msra.mxu0 0.0
    %626 = vmatpush.msra.mxu0 0.0
    %627 = vmatpush.msra.mxu0 0.0
    %628 = vmatpush.msra.mxu0 0.0
    %629 = vmatpush.msra.mxu0 0.0
    %630 = vmatpush.msra.mxu0 0.0
    %631 = vmatpush.msra.mxu0 0.0
    %632 = vmatpush.msra.mxu0 0.0
    %633 = vmatpush.msra.mxu0 0.0
    %634 = vmatpush.msra.mxu0 0.0
    %635 = vmatpush.msra.mxu0 0.0
    %636 = vmatpush.msra.mxu0 %v581
    %637 = vmatpush.msra.mxu0 %v580
    %638 = vmatpush.msra.mxu0 %v579
    %639 = vmatpush.msra.mxu0 %v578
    %640 = vmatmul.f32.gmra.mxu0 %v613
    %v641 = vpop.f32.mrf.mxu0
    %v642 = vadd.f32 %v595, %v641
    %643 = vmatmul.f32.gmra.mxu0 %v616
    %v644 = vpop.f32.mrf.mxu0
    %v645 = vadd.f32 %v600, %v644
    %646 = vmatmul.f32.gmra.mxu0 %v619
    %v647 = vpop.f32.mrf.mxu0
    %v648 = vadd.f32 %v605, %v647
    %649 = vmatmul.f32.gmra.mxu0 %v622
    %v650 = vpop.f32.mrf.mxu0
    %v651 = vadd.f32 %v610, %v650
    %652 = vdwg.mxu0
    %v653 = vmax.f32 %v642, 0.0
    %v654 = vmax.f32 %v645, 0.0
    %v655 = vmax.f32 %v648, 0.0
    %v656 = vmax.f32 %v651, 0.0
    %v657 = vld [vmem:[%s3] sm:$0xff]
    %v658 = vld [vmem:[%s3 + $0x8] sm:$0xff]
    %v659 = vld [vmem:[%s3 + $0x10] sm:$0xff]
    %v660 = vld [vmem:[%s3 + $0x18] sm:$0xff]
    %662 = vset.pattern.permute.xlu0 0
    %663 = vperm.xlu0 %662, %v657
    %v664 = vpop.permute.xlu0 %663
    %667 = vset.pattern.permute.xlu0 0
    %668 = vperm.xlu0 %667, %v658
    %v669 = vpop.permute.xlu0 %668
    %672 = vset.pattern.permute.xlu0 0
    %673 = vperm.xlu0 %672, %v659
    %v674 = vpop.permute.xlu0 %673
    %677 = vset.pattern.permute.xlu0 0
    %678 = vperm.xlu0 %677, %v660
    %v679 = vpop.permute.xlu0 %678
    %v681 = vmul.f32 %v664, %v653
    %v682 = vmul.f32 %v669, %v654
    %v683 = vmul.f32 %v674, %v655
    %v684 = vmul.f32 %v679, %v656
    %v685 = vadd.f32 %v681, %v682
    %v686 = vadd.f32 %v685, %v683
    %v687 = vadd.f32 %v686, %v684
    %v688 = vrot.slane %v687, 4
    %v689 = vadd.f32 %v687, %v688
    %v690 = vrot.slane %v689, 2
    %v691 = vadd.f32 %v689, %v690
    %v692 = vrot.slane %v691, 1
    %v693 = vadd.f32 %v691, %v692
    %v694 = vld [vmem:[#allocation2] sm:$0x1]
    %696 = vset.pattern.permute.xlu0 0
    %697 = vperm.xlu0 %696, %v694
    %v698 = vpop.permute.xlu0 %697
    %v700 = vperm.slane %v698, 0
    %v701 = vadd.f32 %v693, %v700
    %702 = vst [vmem:[%s5] sm:$0x1] %v701
    // Predicated region
    $region30: #{forward.1} parent=1 // pred_check
      _
    $region31: #{forward.1} parent=1 // pred_check_branch
      %704 = sbr.rel (0) target = $region33
    $region32: #{forward.1} parent=1 // pred_region
      _
    $region33: #{forward.1} parent=1 // pred_fallthru
      _
    // Predicated region
    $region34: #{forward.1} parent=1 // pred_check
      _
    $region35: #{forward.1} parent=1 // pred_check_branch
      %706 = sbr.rel (0) target = $region37
    $region36: #{forward.1} parent=1 // pred_region
      _
    $region37: #{forward.1} parent=1 // pred_fallthru
      _
    %707 = vsyncpa [#allocation4], 1
    %708 = vsyncpa [#allocation6], 1

</llo_original>
